<compile_context>
chip_gen: v6e
topology: v6e:2x2x1
jax: 0.10.0
libtpu: 0.0.40
codegen_flags: <defaults>
</compile_context>

<pallas_src>
import jax
import jax.numpy as jnp
from jax.experimental import pallas as pl
from jax.experimental.pallas import tpu as pltpu


def _round_up(x, m):
    return (x + m - 1) // m * m


def gmixer_kernel(xT_ref, w1_ref, b1_ref, w2_ref, b2_ref, w3_ref, b3_ref, o_ref):
    xT = xT_ref[...]                                              # (F, TILE_N) bf16

    # fc1 + relu:  (32, F) @ (F, TILE_N) -> (32, TILE_N), f32 accumulation on MXU.
    h1 = jnp.dot(w1_ref[...], xT, preferred_element_type=jnp.float32)
    h1 = jnp.maximum(h1 + b1_ref[...], 0.0)                       # (32, TILE_N) f32

    # fc2 + relu:  (28, 32) @ (32, TILE_N) -> (28, TILE_N).
    h2 = jnp.dot(w2_ref[...], h1.astype(w2_ref.dtype),
                 preferred_element_type=jnp.float32)
    h2 = jnp.maximum(h2 + b2_ref[...], 0.0)                       # (28, TILE_N) f32

    # fc3 + relu:  28 -> 1 done on the VPU (broadcast multiply) + XLU
    # (cross-sublane reduce) instead of an MXU push with one useful row.
    v = jnp.sum(h2 * w3_ref[...], axis=0, keepdims=True) + b3_ref[...]  # (1, TILE_N)
    o_ref[...] = jnp.maximum(v, 0.0).astype(o_ref.dtype)


def gmixer_forward(inputs, params, *, tile_n=512):
    """inputs: (bs, epi_len, num_feat) float32. Returns (bs, epi_len, 1) float32."""
    bs, epi_len, num_feat = inputs.shape
    n = bs * epi_len

    w1, b1, w2, b2, w3, b3 = params

    # Row tile: multiple of 128 lanes; clamp so tiny problems don't over-pad.
    tile_n = min(tile_n, _round_up(n, 128))
    n_pad = _round_up(n, tile_n)
    num_tiles = n_pad // tile_n

    # Lane-dense transposed layout: x^T is (F, n_pad); batch dim maps to lanes.
    x = inputs.reshape(n, num_feat).astype(jnp.float32)
    x = jnp.pad(x, ((0, n_pad - n), (0, 0)))
    xT = x.T.astype(jnp.bfloat16)                                 # (F, n_pad)

    # Weights transposed to (out, in); matmul weights in bf16 (f32 accumulate),
    # bias / fc3 epilogue kept in f32 (v5e has no bf16 VALU).
    w1T = w1.T.astype(jnp.bfloat16)                               # (32, F)
    w2T = w2.T.astype(jnp.bfloat16)                               # (28, 32)
    w3c = w3.reshape(-1, 1).astype(jnp.float32)                   # (28, 1)
    b1c = b1.reshape(-1, 1).astype(jnp.float32)                   # (32, 1)
    b2c = b2.reshape(-1, 1).astype(jnp.float32)                   # (28, 1)
    b3c = b3.reshape(1, 1).astype(jnp.float32)                    # (1, 1)

    const = lambda i: (0, 0)  # weights/biases stay resident in VMEM across tiles

    flops = 2 * n * (num_feat * 32 + 32 * 28 + 28)
    bytes_accessed = (n * (num_feat * 2 + 4)
                      + (w1T.size + w2T.size) * 2
                      + (w3c.size + b1c.size + b2c.size + b3c.size) * 4)

    # TODO(synk): if profiling shows the x-tile DMA exposed on v5e, add
    # pipeline_mode=pl.Buffered(3) to the x BlockSpec (tiles are only F*TILE_N*2 B).
    out = pl.pallas_call(
        gmixer_kernel,
        out_shape=jax.ShapeDtypeStruct((1, n_pad), jnp.float32),
        grid_spec=pl.GridSpec(
            grid=(num_tiles,),
            in_specs=[
                pl.BlockSpec((num_feat, tile_n), lambda i: (0, i)),
                pl.BlockSpec(w1T.shape, const),
                pl.BlockSpec(b1c.shape, const),
                pl.BlockSpec(w2T.shape, const),
                pl.BlockSpec(b2c.shape, const),
                pl.BlockSpec(w3c.shape, const),
                pl.BlockSpec(b3c.shape, const),
            ],
            out_specs=pl.BlockSpec((1, tile_n), lambda i: (0, i)),
        ),
        compiler_params=pltpu.CompilerParams(
            dimension_semantics=("parallel",)),  # megacore-shardable on v7x
        cost_estimate=pl.CostEstimate(
            flops=flops, transcendentals=0, bytes_accessed=bytes_accessed),
    )(xT, w1T, b1c, w2T, b2c, w3c, b3c)

    return out[0, :n].reshape(bs, epi_len, 1)


def init_params(key, input_shape):
    """Deterministic synthetic parameters matching GMixer.__init__ shapes.

    fc1: Linear(input_shape, 32), fc2: Linear(32, 28), fc3: Linear(28, 1).
    Stored as (in, out) for the reference; the wrapper transposes for the kernel.
    """
    k1, k2, k3, k4, k5, k6 = jax.random.split(key, 6)
    w1 = jax.random.normal(k1, (input_shape, 32), jnp.float32) * 0.1
    b1 = jax.random.normal(k2, (32,), jnp.float32) * 0.1
    w2 = jax.random.normal(k3, (32, 28), jnp.float32) * 0.1
    b2 = jax.random.normal(k4, (28,), jnp.float32) * 0.1
    w3 = jax.random.normal(k5, (28, 1), jnp.float32) * 0.1
    b3 = jax.random.normal(k6, (1,), jnp.float32) * 0.1
    return (w1, b1, w2, b2, w3, b3)


def gmixer_ref(inputs, params):
    """Pure-JAX f32 reference of the PyTorch forward, for verification."""
    w1, b1, w2, b2, w3, b3 = params
    bs, epi_len, num_feat = inputs.shape
    x = inputs.reshape(bs * epi_len, num_feat)
    h1 = jax.nn.relu(x @ w1 + b1)
    h2 = jax.nn.relu(h1 @ w2 + b2)
    v = jax.nn.relu(h2 @ w3 + b3)
    return v.reshape(bs, epi_len, 1)


if __name__ == "__main__":
    # Synthetic config: n_agents=3, goal_shape=4 -> input_shape = 12
    bs, epi_len = 2, 8
    n_agents, goal_shape = 3, 4
    input_shape = n_agents * goal_shape

    key = jax.random.PRNGKey(0)
    k_in, k_par = jax.random.split(key)
    inputs = jax.random.normal(k_in, (bs, epi_len, input_shape), jnp.float32)
    params = init_params(k_par, input_shape)

    v = gmixer_forward(inputs, params)
    v = jax.block_until_ready(v)

    v_ref = gmixer_ref(inputs, params)
    assert v.shape == (bs, epi_len, 1)
    # bf16 matmul inputs with f32 accumulation vs f32 reference -> loosened tolerance.
    assert jnp.allclose(v, v_ref, atol=2e-2, rtol=2e-2), "mismatch vs reference"

    print("KERNEL_OK")
</pallas_src>

<mosaic_0001>
module attributes {stable_mosaic.version = 11 : i64} {
  func.func @gmixer_kernel(%arg0: i32, %arg1: memref<12x128xbf16, #tpu.memory_space<vmem>>, %arg2: memref<32x12xbf16, #tpu.memory_space<vmem>>, %arg3: memref<32x1xf32, #tpu.memory_space<vmem>>, %arg4: memref<28x32xbf16, #tpu.memory_space<vmem>>, %arg5: memref<28x1xf32, #tpu.memory_space<vmem>>, %arg6: memref<28x1xf32, #tpu.memory_space<vmem>>, %arg7: memref<1x1xf32, #tpu.memory_space<vmem>>, %arg8: memref<1x128xf32, #tpu.memory_space<vmem>>) attributes {dimension_semantics = [#tpu.dimension_semantics<parallel>], iteration_bounds = array<i64: 1>, scalar_prefetch = 0 : i64, scratch_operands = 0 : i64, tpu.core_type = #tpu.core_type<tc>, window_params = [{transform_indices = @transform_0, window_bounds = array<i64: 12, 128>}, {pipeline_mode = #tpu.pipeline_mode<synchronous>, transform_indices = @transform_1, window_bounds = array<i64: 32, 12>}, {pipeline_mode = #tpu.pipeline_mode<synchronous>, transform_indices = @transform_2, window_bounds = array<i64: 32, 1>}, {pipeline_mode = #tpu.pipeline_mode<synchronous>, transform_indices = @transform_3, window_bounds = array<i64: 28, 32>}, {pipeline_mode = #tpu.pipeline_mode<synchronous>, transform_indices = @transform_4, window_bounds = array<i64: 28, 1>}, {pipeline_mode = #tpu.pipeline_mode<synchronous>, transform_indices = @transform_5, window_bounds = array<i64: 28, 1>}, {pipeline_mode = #tpu.pipeline_mode<synchronous>, transform_indices = @transform_6, window_bounds = array<i64: 1, 1>}, {transform_indices = @transform_7, window_bounds = array<i64: 1, 128>}]} {
    %c0 = arith.constant 0 : index
    %c0_0 = arith.constant 0 : index
    %0 = vector.load %arg1[%c0, %c0_0] : memref<12x128xbf16, #tpu.memory_space<vmem>>, vector<12x128xbf16>
    %c0_1 = arith.constant 0 : index
    %c0_2 = arith.constant 0 : index
    %1 = vector.load %arg2[%c0_1, %c0_2] : memref<32x12xbf16, #tpu.memory_space<vmem>>, vector<32x12xbf16>
    %cst = arith.constant dense<0.000000e+00> : vector<32x128xf32>
    %2 = tpu.matmul %1, %0, %cst {dimension_numbers = #tpu.dot_dimension_numbers<[1], [0], [0], [1], [0, 0, 1, 1], [], []>} : vector<32x12xbf16>, vector<12x128xbf16>, vector<32x128xf32> -> vector<32x128xf32>
    %c0_3 = arith.constant 0 : index
    %c0_4 = arith.constant 0 : index
    %3 = vector.load %arg3[%c0_3, %c0_4] : memref<32x1xf32, #tpu.memory_space<vmem>>, vector<32x1xf32>
    %4 = vector.broadcast %3 : vector<32x1xf32> to vector<32x128xf32>
    %5 = arith.addf %2, %4 : vector<32x128xf32>
    %cst_5 = arith.constant 0.000000e+00 : f32
    %6 = vector.broadcast %cst_5 : f32 to vector<32x128xf32>
    %7 = arith.maximumf %5, %6 : vector<32x128xf32>
    %c0_6 = arith.constant 0 : index
    %c0_7 = arith.constant 0 : index
    %8 = vector.load %arg4[%c0_6, %c0_7] : memref<28x32xbf16, #tpu.memory_space<vmem>>, vector<28x32xbf16>
    %9 = arith.truncf %7 : vector<32x128xf32> to vector<32x128xbf16>
    %cst_8 = arith.constant dense<0.000000e+00> : vector<28x128xf32>
    %10 = tpu.matmul %8, %9, %cst_8 {dimension_numbers = #tpu.dot_dimension_numbers<[1], [0], [0], [1], [0, 0, 1, 1], [], []>} : vector<28x32xbf16>, vector<32x128xbf16>, vector<28x128xf32> -> vector<28x128xf32>
    %c0_9 = arith.constant 0 : index
    %c0_10 = arith.constant 0 : index
    %11 = vector.load %arg5[%c0_9, %c0_10] : memref<28x1xf32, #tpu.memory_space<vmem>>, vector<28x1xf32>
    %12 = vector.broadcast %11 : vector<28x1xf32> to vector<28x128xf32>
    %13 = arith.addf %10, %12 : vector<28x128xf32>
    %cst_11 = arith.constant 0.000000e+00 : f32
    %14 = vector.broadcast %cst_11 : f32 to vector<28x128xf32>
    %15 = arith.maximumf %13, %14 : vector<28x128xf32>
    %c0_12 = arith.constant 0 : index
    %c0_13 = arith.constant 0 : index
    %16 = vector.load %arg6[%c0_12, %c0_13] : memref<28x1xf32, #tpu.memory_space<vmem>>, vector<28x1xf32>
    %17 = vector.broadcast %16 : vector<28x1xf32> to vector<28x128xf32>
    %18 = arith.mulf %15, %17 : vector<28x128xf32>
    %cst_14 = arith.constant dense<0.000000e+00> : vector<128xf32>
    %19 = vector.multi_reduction <add>, %18, %cst_14 [0] : vector<28x128xf32> to vector<128xf32>
    %20 = vector.shape_cast %19 : vector<128xf32> to vector<1x128xf32>
    %c0_15 = arith.constant 0 : index
    %c0_16 = arith.constant 0 : index
    %21 = vector.load %arg7[%c0_15, %c0_16] : memref<1x1xf32, #tpu.memory_space<vmem>>, vector<1x1xf32>
    %22 = vector.broadcast %21 : vector<1x1xf32> to vector<1x128xf32>
    %23 = arith.addf %20, %22 : vector<1x128xf32>
    %cst_17 = arith.constant 0.000000e+00 : f32
    %24 = vector.broadcast %cst_17 : f32 to vector<1x128xf32>
    %25 = arith.maximumf %23, %24 : vector<1x128xf32>
    %c0_18 = arith.constant 0 : index
    %c0_19 = arith.constant 0 : index
    %26 = vector.load %arg8[%c0_18, %c0_19] : memref<1x128xf32, #tpu.memory_space<vmem>>, vector<1x128xf32>
    tpu.vector_store %arg8[%c0_18, %c0_19], %25 {strides = array<i32>} : memref<1x128xf32, #tpu.memory_space<vmem>>, vector<1x128xf32>,
    return
  }
  func.func @transform_0(%arg0: i32) -> (i32, i32) {
    %c0_i32 = arith.constant 0 : i32
    %c0_i32_0 = arith.constant 0 : i32
    return %c0_i32, %arg0 : i32, i32
  }
  func.func @transform_1(%arg0: i32) -> (i32, i32) {
    %c0_i32 = arith.constant 0 : i32
    %c0_i32_0 = arith.constant 0 : i32
    %c0_i32_1 = arith.constant 0 : i32
    return %c0_i32, %c0_i32_0 : i32, i32
  }
  func.func @transform_2(%arg0: i32) -> (i32, i32) {
    %c0_i32 = arith.constant 0 : i32
    %c0_i32_0 = arith.constant 0 : i32
    %c0_i32_1 = arith.constant 0 : i32
    return %c0_i32, %c0_i32_0 : i32, i32
  }
  func.func @transform_3(%arg0: i32) -> (i32, i32) {
    %c0_i32 = arith.constant 0 : i32
    %c0_i32_0 = arith.constant 0 : i32
    %c0_i32_1 = arith.constant 0 : i32
    return %c0_i32, %c0_i32_0 : i32, i32
  }
  func.func @transform_4(%arg0: i32) -> (i32, i32) {
    %c0_i32 = arith.constant 0 : i32
    %c0_i32_0 = arith.constant 0 : i32
    %c0_i32_1 = arith.constant 0 : i32
    return %c0_i32, %c0_i32_0 : i32, i32
  }
  func.func @transform_5(%arg0: i32) -> (i32, i32) {
    %c0_i32 = arith.constant 0 : i32
    %c0_i32_0 = arith.constant 0 : i32
    %c0_i32_1 = arith.constant 0 : i32
    return %c0_i32, %c0_i32_0 : i32, i32
  }
  func.func @transform_6(%arg0: i32) -> (i32, i32) {
    %c0_i32 = arith.constant 0 : i32
    %c0_i32_0 = arith.constant 0 : i32
    %c0_i32_1 = arith.constant 0 : i32
    return %c0_i32, %c0_i32_0 : i32, i32
  }
  func.func @transform_7(%arg0: i32) -> (i32, i32) {
    %c0_i32 = arith.constant 0 : i32
    %c0_i32_0 = arith.constant 0 : i32
    return %c0_i32, %arg0 : i32, i32
  }
}

</mosaic_0001>

<llo_original>
// kernel: tpu_custom_call.1
$region0: #{tpu_custom_call.1}
  #allocation0 [shape = 'u32[]', space=smem, size = 0x4, offset = 0x4, fixed_abs, tag = 'smem constant byte address 0x4 - core index']
  #allocation1 [shape = 'u32[144,128]{1,0:T(1,128)}', space=vmem, size = 0x12000, scoped, tag = 'internal scratch']
  #allocation2 [shape = 'f32[1,1]{1,0:T(1,128)S(1)}', space=vmem, size = 0x200, scoped, tag = 'scoped memory for tpu_custom_call.1']
  %s0 = inlined_call_operand.vmem [shape: bf16[12,128], index: 0, kind: input, shape index: {}]
  %s1 = inlined_call_operand.vmem [shape: bf16[32,12], index: 1, kind: input, shape index: {}]
  %s2 = inlined_call_operand.vmem [shape: f32[32,1], index: 2, kind: input, shape index: {}]
  %s3 = inlined_call_operand.vmem [shape: bf16[28,32], index: 3, kind: input, shape index: {}]
  %s4 = inlined_call_operand.vmem [shape: f32[28,1], index: 4, kind: input, shape index: {}]
  %s5 = inlined_call_operand.vmem [shape: f32[28,1], index: 5, kind: input, shape index: {}]
  %s6 = inlined_call_operand.<no memory space> [shape: f32[1,1], index: 6, kind: input, shape index: {}]
  %s7 = inlined_call_operand.hbm [shape: f32[1,128], index: 7, kind: output, shape index: {}]
  %s8 = sld [smem:[#allocation0]]
  $region38: #{tpu_custom_call.1} parent=0
    _
  %s10 = ssub.s32 1, %s8
  %s11 = scalar_select 0, %s10, %s8
  %v12 = vstv %s6
  %13 = vst [vmem:[#allocation2] sm:$0x1] %v12
  $region1: #{tpu_custom_call.1} parent=0
    #allocation3 [shape = 'u8[512]{0}', space=vmem, size = 0x400, scoped, tag = 'output window, operand 0, single buffered']
    #allocation4 [shape = 's32[1]{0}', space=sflag, size = 0x4, scoped, tag = 'scoped memory for tpu_custom_call.1']
    %14 = vsyncpa [#allocation4], 0
    // Predicated region
    $region2: #{tpu_custom_call.1} parent=1 // pred_check
      _
    $region3: #{tpu_custom_call.1} parent=1 // pred_check_branch
      %16 = sbr.rel (0) target = $region5
    $region4: #{tpu_custom_call.1} parent=1 // pred_region
      _
    $region5: #{tpu_custom_call.1} parent=1 // pred_fallthru
      _
    // Predicated region
    $region6: #{tpu_custom_call.1} parent=1 // pred_check
      _
    $region7: #{tpu_custom_call.1} parent=1 // pred_check_branch
      %18 = sbr.rel (0) target = $region9
    $region8: #{tpu_custom_call.1} parent=1 // pred_region
      _
    $region9: #{tpu_custom_call.1} parent=1 // pred_fallthru
      _
    // Predicated region
    $region10: #{tpu_custom_call.1} parent=1 // pred_check
      _
    $region11: #{tpu_custom_call.1} parent=1 // pred_check_branch
      %20 = sbr.rel (0) target = $region13
    $region12: #{tpu_custom_call.1} parent=1 // pred_region
      _
    $region13: #{tpu_custom_call.1} parent=1 // pred_fallthru
      _
    // Predicated region
    $region14: #{tpu_custom_call.1} parent=1 // pred_check
      _
    $region15: #{tpu_custom_call.1} parent=1 // pred_check_branch
      %22 = sbr.rel (0) target = $region17
    $region16: #{tpu_custom_call.1} parent=1 // pred_region
      _
    $region17: #{tpu_custom_call.1} parent=1 // pred_fallthru
      _
    // Predicated region
    $region18: #{tpu_custom_call.1} parent=1 // pred_check
      _
    $region19: #{tpu_custom_call.1} parent=1 // pred_check_branch
      %24 = sbr.rel (0) target = $region21
    $region20: #{tpu_custom_call.1} parent=1 // pred_region
      _
    $region21: #{tpu_custom_call.1} parent=1 // pred_fallthru
      _
    // Predicated region
    $region22: #{tpu_custom_call.1} parent=1 // pred_check
      _
    $region23: #{tpu_custom_call.1} parent=1 // pred_check_branch
      %26 = sbr.rel (0) target = $region25
    $region24: #{tpu_custom_call.1} parent=1 // pred_region
      _
    $region25: #{tpu_custom_call.1} parent=1 // pred_fallthru
      _
    // Predicated region
    $region26: #{tpu_custom_call.1} parent=1 // pred_check
      _
    $region27: #{tpu_custom_call.1} parent=1 // pred_check_branch
      %28 = sbr.rel (0) target = $region29
    $region28: #{tpu_custom_call.1} parent=1 // pred_region
      _
    $region29: #{tpu_custom_call.1} parent=1 // pred_fallthru
      _
    %v30 = vld [vmem:[%s0] sm:$0xf]
    %v31 = vld [vmem:[%s0 + $0x4] sm:$0x3]
    %v32 = vld [vmem:[%s1] sm:$0xf]
    %v33 = vld [vmem:[%s1 + $0x4] sm:$0xf]
    %v34 = vld [vmem:[%s1 + $0x8] sm:$0xf]
    %v35 = vld [vmem:[%s1 + $0xc] sm:$0xf]
    %v36 = vld [vmem:[%s2] sm:$0xff]
    %v37 = vld [vmem:[%s2 + $0x8] sm:$0xff]
    %v38 = vld [vmem:[%s2 + $0x10] sm:$0xff]
    %v39 = vld [vmem:[%s2 + $0x18] sm:$0xff]
    %41 = vset.pattern.permute.xlu0 0
    %42 = vperm.xlu0 %41, %v36
    %v43 = vpop.permute.xlu0 %42
    %46 = vset.pattern.permute.xlu0 0
    %47 = vperm.xlu0 %46, %v37
    %v48 = vpop.permute.xlu0 %47
    %51 = vset.pattern.permute.xlu0 0
    %52 = vperm.xlu0 %51, %v38
    %v53 = vpop.permute.xlu0 %52
    %56 = vset.pattern.permute.xlu0 0
    %57 = vperm.xlu0 %56, %v39
    %v58 = vpop.permute.xlu0 %57
    %v64 = vunpack.c.l.b16 %v32
    %v65 = vunpack.c.l.b16 %v33
    %v66 = vunpack.c.l.b16 %v34
    %v67 = vunpack.c.l.b16 %v35
    %v68 = vpack.c.b16 %v65, %v64
    %v69 = vpack.c.b16 %v67, %v66
    %v72 = vunpack.c.l.b16 %v30
    %v73 = vunpack.c.l.b16 %v31
    %v74 = vpack.c.b16 %v73, %v72
    %vm75 = vcmask 97280
    %v77 = vsel %vm75, %v68, 0
    %v80 = vsel %vm75, %v69, 0
    %vm82 = vcmask 1045504
    %v84 = vsel %vm82, %v74, 0
    %86 = vmatprep.subr.bf16.mxu0 0
    %87 = vmatpush1.bf16.msra.mxu0 0
    %88 = vmatprep.subr.bf16.mxu0 0
    %89 = vmatpush1.bf16.msra.mxu0 0
    %90 = vmatprep.subr.bf16.mxu0 0
    %91 = vmatpush1.bf16.msra.mxu0 0
    %92 = vmatprep.subr.bf16.mxu0 0
    %93 = vmatpush1.bf16.msra.mxu0 0
    %94 = vmatprep.subr.bf16.mxu0 0
    %95 = vmatpush1.bf16.msra.mxu0 0
    %96 = vmatprep.subr.bf16.mxu0 0
    %97 = vmatpush1.bf16.msra.mxu0 0
    %98 = vmatprep.subr.bf16.mxu0 0
    %99 = vmatpush1.bf16.msra.mxu0 0
    %100 = vmatprep.subr.bf16.mxu0 0
    %101 = vmatpush1.bf16.msra.mxu0 %v84
    %102 = vmatprep.subr.bf16.mxu0 0
    %103 = vmatpush2.bf16.msra.mxu0 0
    %104 = vmatprep.subr.bf16.mxu0 0
    %105 = vmatpush2.bf16.msra.mxu0 0
    %106 = vmatprep.subr.bf16.mxu0 0
    %107 = vmatpush2.bf16.msra.mxu0 0
    %108 = vmatprep.subr.bf16.mxu0 0
    %109 = vmatpush2.bf16.msra.mxu0 0
    %110 = vmatprep.subr.bf16.mxu0 0
    %111 = vmatpush2.bf16.msra.mxu0 0
    %112 = vmatprep.subr.bf16.mxu0 0
    %113 = vmatpush2.bf16.msra.mxu0 0
    %114 = vmatprep.subr.bf16.mxu0 0
    %115 = vmatpush2.bf16.msra.mxu0 0
    %116 = vmatprep.subr.bf16.mxu0 0
    %117 = vmatpush2.bf16.msra.mxu0 0
    %118 = vmatprep.mubr.bf16.mxu0 0
    %119 = vmatmul.mubr.bf16.gmra.mxu0 %v77
    %v120 = vpop.f32.mrf.mxu0
    %v121 = vadd.f32 %v43, %v120
    %v122 = vpop.f32.mrf.mxu0
    %v123 = vpop.f32.mrf.mxu0
    %v124 = vadd.f32 %v48, %v123
    %v125 = vpop.f32.mrf.mxu0
    %126 = vmatprep.mubr.bf16.mxu0 0
    %127 = vmatmul.mubr.bf16.gmra.mxu0 %v80
    %v128 = vpop.f32.mrf.mxu0
    %v129 = vadd.f32 %v53, %v128
    %v130 = vpop.f32.mrf.mxu0
    %v131 = vpop.f32.mrf.mxu0
    %v132 = vadd.f32 %v58, %v131
    %v133 = vpop.f32.mrf.mxu0
    %134 = vdwg.mxu0
    %v135 = vmax.f32 %v121, 0.0
    %v136 = vmax.f32 %v124, 0.0
    %v137 = vmax.f32 %v129, 0.0
    %v138 = vmax.f32 %v132, 0.0
    %v139 = vld [vmem:[%s3] sm:$0xf]
    %v140 = vld [vmem:[%s3 + $0x4] sm:$0xf]
    %v141 = vld [vmem:[%s3 + $0x8] sm:$0xf]
    %v142 = vld [vmem:[%s3 + $0xc] sm:$0x3]
    %v143 = vpack.c.bf16 %v136, %v135
    %v144 = vpack.c.bf16 %v138, %v137
    %v145 = vld [vmem:[%s4] sm:$0xff]
    %v146 = vld [vmem:[%s4 + $0x8] sm:$0xff]
    %v147 = vld [vmem:[%s4 + $0x10] sm:$0xff]
    %v148 = vld [vmem:[%s4 + $0x18] sm:$0xf]
    %150 = vset.pattern.permute.xlu0 0
    %151 = vperm.xlu0 %150, %v145
    %v152 = vpop.permute.xlu0 %151
    %155 = vset.pattern.permute.xlu0 0
    %156 = vperm.xlu0 %155, %v146
    %v157 = vpop.permute.xlu0 %156
    %160 = vset.pattern.permute.xlu0 0
    %161 = vperm.xlu0 %160, %v147
    %v162 = vpop.permute.xlu0 %161
    %165 = vset.pattern.permute.xlu0 0
    %166 = vperm.xlu0 %165, %v148
    %v167 = vpop.permute.xlu0 %166
    %v173 = vunpack.c.l.b16 %v139
    %v174 = vunpack.c.l.b16 %v140
    %v175 = vunpack.c.l.b16 %v141
    %v176 = vunpack.c.l.b16 %v142
    %v177 = vpack.c.b16 %v174, %v173
    %v178 = vpack.c.b16 %v176, %v175
    %vm179 = vcmask 261120
    %v181 = vsel %vm179, %v177, 0
    %v184 = vsel %vm179, %v178, 0
    %186 = vmatprep.subr.bf16.mxu0 0
    %187 = vmatpush1.bf16.msra.mxu0 0
    %188 = vmatprep.subr.bf16.mxu0 0
    %189 = vmatpush1.bf16.msra.mxu0 0
    %190 = vmatprep.subr.bf16.mxu0 0
    %191 = vmatpush1.bf16.msra.mxu0 0
    %192 = vmatprep.subr.bf16.mxu0 0
    %193 = vmatpush1.bf16.msra.mxu0 0
    %194 = vmatprep.subr.bf16.mxu0 0
    %195 = vmatpush1.bf16.msra.mxu0 0
    %196 = vmatprep.subr.bf16.mxu0 0
    %197 = vmatpush1.bf16.msra.mxu0 0
    %198 = vmatprep.subr.bf16.mxu0 0
    %199 = vmatpush1.bf16.msra.mxu0 %v144
    %200 = vmatprep.subr.bf16.mxu0 0
    %201 = vmatpush1.bf16.msra.mxu0 %v143
    %202 = vmatprep.subr.bf16.mxu0 0
    %203 = vmatpush2.bf16.msra.mxu0 0
    %204 = vmatprep.subr.bf16.mxu0 0
    %205 = vmatpush2.bf16.msra.mxu0 0
    %206 = vmatprep.subr.bf16.mxu0 0
    %207 = vmatpush2.bf16.msra.mxu0 0
    %208 = vmatprep.subr.bf16.mxu0 0
    %209 = vmatpush2.bf16.msra.mxu0 0
    %210 = vmatprep.subr.bf16.mxu0 0
    %211 = vmatpush2.bf16.msra.mxu0 0
    %212 = vmatprep.subr.bf16.mxu0 0
    %213 = vmatpush2.bf16.msra.mxu0 0
    %214 = vmatprep.subr.bf16.mxu0 0
    %215 = vmatpush2.bf16.msra.mxu0 0
    %216 = vmatprep.subr.bf16.mxu0 0
    %217 = vmatpush2.bf16.msra.mxu0 0
    %218 = vmatprep.mubr.bf16.mxu0 0
    %219 = vmatmul.mubr.bf16.gmra.mxu0 %v181
    %v220 = vpop.f32.mrf.mxu0
    %v221 = vadd.f32 %v152, %v220
    %v222 = vpop.f32.mrf.mxu0
    %v223 = vpop.f32.mrf.mxu0
    %v224 = vadd.f32 %v157, %v223
    %v225 = vpop.f32.mrf.mxu0
    %226 = vmatprep.mubr.bf16.mxu0 0
    %227 = vmatmul.mubr.bf16.gmra.mxu0 %v184
    %v228 = vpop.f32.mrf.mxu0
    %v229 = vadd.f32 %v162, %v228
    %v230 = vpop.f32.mrf.mxu0
    %v231 = vpop.f32.mrf.mxu0
    %v232 = vadd.f32 %v167, %v231
    %v233 = vpop.f32.mrf.mxu0
    %234 = vdwg.mxu0
    %v235 = vmax.f32 %v221, 0.0
    %v236 = vmax.f32 %v224, 0.0
    %v237 = vmax.f32 %v229, 0.0
    %v238 = vmax.f32 %v232, 0.0
    %v239 = vld [vmem:[%s5] sm:$0xff]
    %v240 = vld [vmem:[%s5 + $0x8] sm:$0xff]
    %v241 = vld [vmem:[%s5 + $0x10] sm:$0xff]
    %v242 = vld [vmem:[%s5 + $0x18] sm:$0xf]
    %244 = vset.pattern.permute.xlu0 0
    %245 = vperm.xlu0 %244, %v239
    %v246 = vpop.permute.xlu0 %245
    %249 = vset.pattern.permute.xlu0 0
    %250 = vperm.xlu0 %249, %v240
    %v251 = vpop.permute.xlu0 %250
    %254 = vset.pattern.permute.xlu0 0
    %255 = vperm.xlu0 %254, %v241
    %v256 = vpop.permute.xlu0 %255
    %259 = vset.pattern.permute.xlu0 0
    %260 = vperm.xlu0 %259, %v242
    %v261 = vpop.permute.xlu0 %260
    %v263 = vmul.f32 %v235, %v246
    %v264 = vmul.f32 %v236, %v251
    %v265 = vmul.f32 %v237, %v256
    %v266 = vmul.f32 %v238, %v261
    %v267 = vadd.f32 %v263, %v264
    %v268 = vadd.f32 %v267, %v265
    %vm269 = vcmask 1043456
    %v270 = vsel %vm269, %v266, 0.0
    %v271 = vadd.f32 %v268, %v270
    %v272 = vrot.slane %v271, 4
    %v273 = vadd.f32 %v271, %v272
    %v274 = vrot.slane %v273, 2
    %v275 = vadd.f32 %v273, %v274
    %v276 = vrot.slane %v275, 1
    %v277 = vadd.f32 %v275, %v276
    %v278 = vld [vmem:[#allocation2] sm:$0x1]
    %280 = vset.pattern.permute.xlu0 0
    %281 = vperm.xlu0 %280, %v278
    %v282 = vpop.permute.xlu0 %281
    %v284 = vlaneseq
    %v285 = vshrl.u32 %v284, 7
    %v286 = vsub.s32 0, %v285
    %v287 = vrot.slane %v282, %v286
    %v288 = vadd.f32 %v277, %v287
    %v289 = vmax.f32 %v288, 0.0
    %290 = vst [vmem:[#allocation3] sm:$0x1] %v289
    // Predicated region
    $region30: #{tpu_custom_call.1} parent=1 // pred_check
      _
    $region31: #{tpu_custom_call.1} parent=1 // pred_check_branch
      %292 = sbr.rel (0) target = $region33
    $region32: #{tpu_custom_call.1} parent=1 // pred_region
      %s294 = ssub.s32 16, 16
      %295 = vsyncadd [#allocation4], %s294
      %s297 = sshll.u32 [#allocation3], 4
      %s298 = int_to_ptr.vmem [resolvable:$true] %s297
      %300 = dma.vmem_to_hbm [thread:$0]  %s298, 16, %s7, [#allocation4]
    $region33: #{tpu_custom_call.1} parent=1 // pred_fallthru
      _
    // Predicated region
    $region34: #{tpu_custom_call.1} parent=1 // pred_check
      _
    $region35: #{tpu_custom_call.1} parent=1 // pred_check_branch
      %302 = sbr.rel (0) target = $region37
    $region36: #{tpu_custom_call.1} parent=1 // pred_region
      %303 = dma.done [#allocation4], 16
    $region37: #{tpu_custom_call.1} parent=1 // pred_fallthru
      _
    %304 = vsyncpa [#allocation4], 1

</llo_original>
